<compile_context>
chip_gen: v7x
topology: tpu7x:2x2x1
jax: 0.10.0
libtpu: 0.0.40
codegen_flags: <defaults>
</compile_context>

<pallas_src>
import math
import jax
import jax.numpy as jnp
from jax.experimental import pallas as pl
from jax.experimental.pallas import tpu as pltpu


# --------------------------------------------------------------------------- #
# Kernels
# --------------------------------------------------------------------------- #
def _proj_kernel(x_ref, w_ref, b_ref, o_ref):
    """Full-K path: x (tm, K) @ w (K, tn) + b (1, tn) -> o (tm, tn)."""
    acc = jnp.dot(x_ref[...], w_ref[...], preferred_element_type=jnp.float32)
    o_ref[...] = (acc + b_ref[...].astype(jnp.float32)).astype(o_ref.dtype)


def _proj_kernel_ktiled(x_ref, w_ref, b_ref, o_ref, acc_ref):
    """K-tiled path: innermost 'arbitrary' K axis, f32 VMEM accumulator."""
    k = pl.program_id(2)

    @pl.when(k == 0)
    def _():
        acc_ref[...] = jnp.zeros_like(acc_ref)

    acc_ref[...] += jnp.dot(x_ref[...], w_ref[...],
                            preferred_element_type=jnp.float32)

    @pl.when(k == pl.num_programs(2) - 1)
    def _():
        o_ref[...] = (acc_ref[...]
                      + b_ref[...].astype(jnp.float32)).astype(o_ref.dtype)


# --------------------------------------------------------------------------- #
# Config helpers
# --------------------------------------------------------------------------- #
def _vmem_capacity_bytes() -> int:
    """Per-generation VMEM capacity; conservative fallback if unavailable."""
    try:
        info = pltpu.get_tpu_info()
        cap = getattr(info, "vmem_capacity_bytes", None)
        if cap:
            return int(cap)
    except Exception:
        pass
    return 64 << 20  # v7x-safe fallback


def _select_tiles(M, K, V, x_b, w_b, b_b, o_b, budget, tm, tn, tk):
    """Pick (tm, tn, tk) that fit the double-buffered VMEM budget.

    Preference order (per review): keep tn as large as possible (it controls
    the dominant x re-read stream), shrink tm before tn, and only tile K when
    the full-K weight slab cannot be double-buffered.
    """
    def footprint(tm_, tn_, tk_, tiled):
        f = 2 * (tm_ * tk_ * x_b          # x tiles (double buffered)
                 + tk_ * tn_ * w_b        # W slabs
                 + 8 * tn_ * b_b          # bias slab (sublane padded)
                 + tm_ * tn_ * o_b)       # output tiles
        if tiled:
            f += tm_ * tn_ * 4            # f32 accumulator scratch
        return f

    def clamp_tm(t):
        return M if t >= M else max(16, (t // 16) * 16)

    tm_user = tm is not None
    tm0 = clamp_tm(tm if tm is not None else 256)
    tm_cands = [tm0] if (tm_user or tm0 <= 128) else [tm0, clamp_tm(128)]

    if tn is not None:
        tn_cands = [V if tn >= V else max(128, (tn // 128) * 128)]
    elif V <= 128:
        tn_cands = [V]
    else:
        tn_cands = [t for t in (2048, 1024, 512, 256, 128) if t <= V] or [V]

    tk_fixed = None
    if tk is not None:
        if tk >= K:
            tk_fixed = K
        elif tk % 128 == 0 and K % tk == 0:
            tk_fixed = tk
        else:
            tk_fixed = K  # invalid request -> keep full K (correctness first)

    for tn_c in tn_cands:
        for tm_c in tm_cands:
            if tk_fixed is not None:
                if footprint(tm_c, tn_c, tk_fixed, tk_fixed < K) <= budget:
                    return tm_c, tn_c, tk_fixed
                continue
            if footprint(tm_c, tn_c, K, False) <= budget:
                return tm_c, tn_c, K
            for tk_c in (4096, 2048, 1024, 512, 256, 128):
                if tk_c < K and K % tk_c == 0 and \
                        footprint(tm_c, tn_c, tk_c, True) <= budget:
                    return tm_c, tn_c, tk_c

    # Nothing fit the budget: most conservative combo (vmem limit is raised
    # to the computed requirement downstream).
    return tm_cands[-1], tn_cands[-1], (tk_fixed if tk_fixed is not None else K)


# --------------------------------------------------------------------------- #
# Wrapper
# --------------------------------------------------------------------------- #
def projection_layer(x, w_t, b, *, tm=256, tn=None, tk=None, out_dtype=None):
    """nn.Linear(d_model, vocab) forward: (B, S, D) -> (B, S, V).

    x:   (batch, seq_len, d_model)
    w_t: (d_model, vocab)   pre-transposed nn.Linear weight
    b:   (vocab,)
    """
    batch, seq_len, d_model = x.shape
    kdim, vocab = w_t.shape
    assert kdim == d_model and b.shape == (vocab,)
    out_dtype = out_dtype or x.dtype
    M = batch * seq_len

    x_b = jnp.dtype(x.dtype).itemsize
    w_b = jnp.dtype(w_t.dtype).itemsize
    bb = jnp.dtype(b.dtype).itemsize
    o_b = jnp.dtype(out_dtype).itemsize

    capacity = _vmem_capacity_bytes()
    budget = int(capacity * 0.75)

    tm, tn, tk = _select_tiles(M, d_model, vocab, x_b, w_b, bb, o_b,
                               budget, tm, tn, tk)

    # No padding: ragged M / N edges handled by the cdiv grid (boundary blocks).
    x2d = x.reshape(M, d_model)
    b2d = b.reshape(1, vocab)

    m_tiles = pl.cdiv(M, tm)
    n_tiles = pl.cdiv(vocab, tn)
    k_tiles = d_model // tk if tk < d_model else 1

    if k_tiles == 1:
        # N outermost, M innermost: each (K, tn) weight slab streams from HBM
        # exactly once and is reused across all row tiles.
        grid = (n_tiles, m_tiles)
        in_specs = [
            pl.BlockSpec((tm, d_model), lambda j, i: (i, 0)),   # x row tile
            pl.BlockSpec((d_model, tn), lambda j, i: (0, j)),   # W column slab
            pl.BlockSpec((1, tn), lambda j, i: (0, j)),         # bias slab
        ]
        out_specs = pl.BlockSpec((tm, tn), lambda j, i: (i, j))
        scratch = []
        kernel = _proj_kernel
        dims = ("parallel", "arbitrary")   # pin megacore split to N (v7x)
    else:
        # K does not fit VMEM: innermost reduction axis with f32 accumulator.
        grid = (n_tiles, m_tiles, k_tiles)
        in_specs = [
            pl.BlockSpec((tm, tk), lambda j, i, k: (i, k)),
            pl.BlockSpec((tk, tn), lambda j, i, k: (k, j)),
            pl.BlockSpec((1, tn), lambda j, i, k: (0, j)),
        ]
        out_specs = pl.BlockSpec((tm, tn), lambda j, i, k: (i, j))
        scratch = [pltpu.VMEM((tm, tn), jnp.float32)]
        kernel = _proj_kernel_ktiled
        dims = ("parallel", "arbitrary", "arbitrary")

    # VMEM requirement from the actual dtypes; never clamp below it.
    req = 2 * (tm * tk * x_b + tk * tn * w_b + 8 * tn * bb + tm * tn * o_b)
    if k_tiles > 1:
        req += tm * tn * 4
    vmem_limit = int(min(max(req + (4 << 20), 32 << 20), max(capacity, req)))

    # Real traffic: x re-read once per N slab; W re-read per M tile only when
    # K is tiled; bias read once per N slab (constant across M and K).
    w_reads = m_tiles if k_tiles > 1 else 1
    cost = pl.CostEstimate(
        flops=2 * M * d_model * vocab,
        transcendentals=0,
        bytes_accessed=(M * d_model * x_b * n_tiles
                        + d_model * vocab * w_b * w_reads
                        + vocab * bb
                        + M * vocab * o_b),
    )

    out2d = pl.pallas_call(
        kernel,
        out_shape=jax.ShapeDtypeStruct((M, vocab), out_dtype),
        grid_spec=pltpu.PrefetchScalarGridSpec(
            num_scalar_prefetch=0,
            grid=grid,
            in_specs=in_specs,
            out_specs=out_specs,
            scratch_shapes=scratch,
        ),
        compiler_params=pltpu.CompilerParams(
            dimension_semantics=dims,
            vmem_limit_bytes=vmem_limit,
        ),
        cost_estimate=cost,
    )(x2d, w_t, b2d)

    return out2d.reshape(batch, seq_len, vocab)


# --------------------------------------------------------------------------- #
# Tests
# --------------------------------------------------------------------------- #
if __name__ == "__main__":
    key = jax.random.PRNGKey(0)

    # ---- test 1: small shapes matching the module's forward signature ------
    batch, seq_len, d_model, vocab_size = 2, 8, 32, 64
    kx, kw, kb = jax.random.split(key, 3)

    bound = 1.0 / math.sqrt(d_model)
    # PyTorch stores weight as (vocab, d_model); keep the transposed layout.
    weight = jax.random.uniform(kw, (vocab_size, d_model), jnp.float32,
                                minval=-bound, maxval=bound)
    bias = jax.random.uniform(kb, (vocab_size,), jnp.float32,
                              minval=-bound, maxval=bound)
    w_t = weight.T
    x = jax.random.normal(kx, (batch, seq_len, d_model), jnp.float32)

    out = jax.block_until_ready(projection_layer(x, w_t, bias))
    ref = x @ w_t + bias
    assert out.shape == (batch, seq_len, vocab_size)
    assert jnp.allclose(out, ref, atol=1e-5, rtol=1e-5)

    # ---- test 2: unaligned dims exercising ragged M / N boundary blocks -----
    b2, s2, d2, v2 = 2, 24, 160, 300
    k1, k2, k3 = jax.random.split(jax.random.PRNGKey(1), 3)
    bound2 = 1.0 / math.sqrt(d2)
    w_t2 = jax.random.uniform(k1, (d2, v2), jnp.float32,
                              minval=-bound2, maxval=bound2)
    bias2 = jax.random.uniform(k2, (v2,), jnp.float32,
                               minval=-bound2, maxval=bound2)
    x2 = jax.random.normal(k3, (b2, s2, d2), jnp.float32)

    out2 = jax.block_until_ready(projection_layer(x2, w_t2, bias2))
    ref2 = x2 @ w_t2 + bias2
    assert out2.shape == (b2, s2, v2)
    assert jnp.allclose(out2, ref2, atol=1e-4, rtol=1e-5)

    # ---- test 3: force the K-tiled accumulator path (tk < d_model) ----------
    b3, s3, d3, v3 = 2, 16, 256, 384
    k4, k5, k6 = jax.random.split(jax.random.PRNGKey(2), 3)
    bound3 = 1.0 / math.sqrt(d3)
    w_t3 = jax.random.uniform(k4, (d3, v3), jnp.float32,
                              minval=-bound3, maxval=bound3)
    bias3 = jax.random.uniform(k5, (v3,), jnp.float32,
                               minval=-bound3, maxval=bound3)
    x3 = jax.random.normal(k6, (b3, s3, d3), jnp.float32)

    out3 = jax.block_until_ready(projection_layer(x3, w_t3, bias3, tk=128))
    ref3 = x3 @ w_t3 + bias3
    assert out3.shape == (b3, s3, v3)
    assert jnp.allclose(out3, ref3, atol=1e-4, rtol=1e-5)

    print("KERNEL_OK")
</pallas_src>

<mosaic_0001>
module attributes {stable_mosaic.version = 11 : i64} {
  func.func @_proj_kernel(%arg0: i32, %arg1: i32, %arg2: memref<16x32xf32, #tpu.memory_space<vmem>>, %arg3: memref<32x64xf32, #tpu.memory_space<vmem>>, %arg4: memref<1x64xf32, #tpu.memory_space<vmem>>, %arg5: memref<16x64xf32, #tpu.memory_space<vmem>>) attributes {dimension_semantics = [#tpu.dimension_semantics<parallel>, #tpu.dimension_semantics<arbitrary>], iteration_bounds = array<i64: 1, 1>, scalar_prefetch = 0 : i64, scratch_operands = 0 : i64, tpu.core_type = #tpu.core_type<tc>, window_params = [{transform_indices = @transform_0, window_bounds = array<i64: 16, 32>}, {transform_indices = @transform_1, window_bounds = array<i64: 32, 64>}, {transform_indices = @transform_2, window_bounds = array<i64: 1, 64>}, {transform_indices = @transform_3, window_bounds = array<i64: 16, 64>}]} {
    %c0 = arith.constant 0 : index
    %c0_0 = arith.constant 0 : index
    %0 = vector.load %arg2[%c0, %c0_0] : memref<16x32xf32, #tpu.memory_space<vmem>>, vector<16x32xf32>
    %c0_1 = arith.constant 0 : index
    %c0_2 = arith.constant 0 : index
    %1 = vector.load %arg3[%c0_1, %c0_2] : memref<32x64xf32, #tpu.memory_space<vmem>>, vector<32x64xf32>
    %cst = arith.constant dense<0.000000e+00> : vector<16x64xf32>
    %2 = tpu.matmul %0, %1, %cst {dimension_numbers = #tpu.dot_dimension_numbers<[1], [0], [0], [1], [0, 0, 1, 1], [], []>} : vector<16x32xf32>, vector<32x64xf32>, vector<16x64xf32> -> vector<16x64xf32>
    %c0_3 = arith.constant 0 : index
    %c0_4 = arith.constant 0 : index
    %3 = vector.load %arg4[%c0_3, %c0_4] : memref<1x64xf32, #tpu.memory_space<vmem>>, vector<1x64xf32>
    %4 = vector.broadcast %3 : vector<1x64xf32> to vector<16x64xf32>
    %5 = arith.addf %2, %4 : vector<16x64xf32>
    %c0_5 = arith.constant 0 : index
    %c0_6 = arith.constant 0 : index
    %6 = vector.load %arg5[%c0_5, %c0_6] : memref<16x64xf32, #tpu.memory_space<vmem>>, vector<16x64xf32>
    tpu.vector_store %arg5[%c0_5, %c0_6], %5 {strides = array<i32>} : memref<16x64xf32, #tpu.memory_space<vmem>>, vector<16x64xf32>,
    return
  }
  func.func @transform_0(%arg0: i32, %arg1: i32) -> (i32, i32) {
    %c0_i32 = arith.constant 0 : i32
    %c0_i32_0 = arith.constant 0 : i32
    return %arg1, %c0_i32 : i32, i32
  }
  func.func @transform_1(%arg0: i32, %arg1: i32) -> (i32, i32) {
    %c0_i32 = arith.constant 0 : i32
    %c0_i32_0 = arith.constant 0 : i32
    return %c0_i32, %arg0 : i32, i32
  }
  func.func @transform_2(%arg0: i32, %arg1: i32) -> (i32, i32) {
    %c0_i32 = arith.constant 0 : i32
    %c0_i32_0 = arith.constant 0 : i32
    return %c0_i32, %arg0 : i32, i32
  }
  func.func @transform_3(%arg0: i32, %arg1: i32) -> (i32, i32) {
    %c0_i32 = arith.constant 0 : i32
    return %arg1, %arg0 : i32, i32
  }
}

</mosaic_0001>

<llo_original>
// kernel: tpu_custom_call.1
$region0: #{tpu_custom_call.1}
  #allocation0 [shape = 'u32[]', space=smem, size = 0x4, offset = 0x4, fixed_abs, tag = 'smem constant byte address 0x4 - core index']
  #allocation1 [shape = 'u32[144,128]{1,0:T(1,128)}', space=vmem, size = 0x12000, scoped, tag = 'internal scratch']
  %s0 = inlined_call_operand.hbm [shape: f32[16,32], index: 0, kind: input, shape index: {}]
  %s1 = inlined_call_operand.hbm [shape: f32[32,64], index: 1, kind: input, shape index: {}]
  %s2 = inlined_call_operand.vmem [shape: f32[1,64], index: 2, kind: input, shape index: {}]
  %s3 = inlined_call_operand.hbm [shape: f32[16,64], index: 3, kind: output, shape index: {}]
  %s4 = sld [smem:[#allocation0]]
  $region30: #{tpu_custom_call.1} parent=0
    _
  %s6 = ssub.s32 1, %s4
  %s7 = scalar_select 0, %s6, %s4
  $region1: #{tpu_custom_call.1} parent=0
    #allocation2 [shape = 'u8[8192]{0}', space=vmem, size = 0x2000, scoped, tag = 'input window, operand 0, single buffered']
    #allocation3 [shape = 's32[1]{0}', space=sflag, size = 0x4, scoped, tag = 'scoped memory for tpu_custom_call.1']
    #allocation4 [shape = 's32[1]{0}', space=sflag, size = 0x4, scoped, tag = 'scoped memory for tpu_custom_call.1']
    #allocation5 [shape = 'u8[16384]{0}', space=vmem, size = 0x4000, scoped, tag = 'input window, operand 1, single buffered']
    #allocation6 [shape = 's32[1]{0}', space=sflag, size = 0x4, scoped, tag = 'scoped memory for tpu_custom_call.1']
    #allocation7 [shape = 'u8[8192]{0}', space=vmem, size = 0x2000, scoped, tag = 'output window, operand 0, single buffered']
    %8 = vsyncpa [#allocation3], 0
    %9 = vsyncpa [#allocation6], 0
    %10 = vsyncpa [#allocation4], 0
    // Predicated region
    $region2: #{tpu_custom_call.1} parent=1 // pred_check
      _
    $region3: #{tpu_custom_call.1} parent=1 // pred_check_branch
      %12 = sbr.rel (0) target = $region5
    $region4: #{tpu_custom_call.1} parent=1 // pred_region
      %s14 = ssub.s32 256, 256
      %15 = vsyncadd [#allocation3], %s14
      %s16 = sshll.u32 [#allocation2], 4
      %s17 = int_to_ptr.vmem [resolvable:$true] %s16
      %22 = dma.hbm_to_vmem [thread:$0]  %s0, 256, %s17, [#allocation3], 128, 128, 8
    $region5: #{tpu_custom_call.1} parent=1 // pred_fallthru
      _
    // Predicated region
    $region6: #{tpu_custom_call.1} parent=1 // pred_check
      _
    $region7: #{tpu_custom_call.1} parent=1 // pred_check_branch
      %24 = sbr.rel (0) target = $region9
    $region8: #{tpu_custom_call.1} parent=1 // pred_region
      %s26 = ssub.s32 512, 512
      %27 = vsyncadd [#allocation6], %s26
      %s28 = sshll.u32 [#allocation5], 4
      %s29 = int_to_ptr.vmem [resolvable:$true] %s28
      %34 = dma.hbm_to_vmem [thread:$0]  %s1, 512, %s29, [#allocation6], 128, 128, 8
    $region9: #{tpu_custom_call.1} parent=1 // pred_fallthru
      _
    // Predicated region
    $region10: #{tpu_custom_call.1} parent=1 // pred_check
      _
    $region11: #{tpu_custom_call.1} parent=1 // pred_check_branch
      %36 = sbr.rel (0) target = $region13
    $region12: #{tpu_custom_call.1} parent=1 // pred_region
      _
    $region13: #{tpu_custom_call.1} parent=1 // pred_fallthru
      _
    // Predicated region
    $region14: #{tpu_custom_call.1} parent=1 // pred_check
      _
    $region15: #{tpu_custom_call.1} parent=1 // pred_check_branch
      %38 = sbr.rel (0) target = $region17
    $region16: #{tpu_custom_call.1} parent=1 // pred_region
      %39 = dma.done [#allocation3], 256
    $region17: #{tpu_custom_call.1} parent=1 // pred_fallthru
      _
    // Predicated region
    $region18: #{tpu_custom_call.1} parent=1 // pred_check
      _
    $region19: #{tpu_custom_call.1} parent=1 // pred_check_branch
      %41 = sbr.rel (0) target = $region21
    $region20: #{tpu_custom_call.1} parent=1 // pred_region
      %42 = dma.done [#allocation6], 512
    $region21: #{tpu_custom_call.1} parent=1 // pred_fallthru
      _
    %v43 = vld [vmem:[#allocation2] sm:$0xff]
    %v44 = vld [vmem:[#allocation2 + $0x8] sm:$0xff]
    %v45 = vld [vmem:[#allocation5] sm:$0xff]
    %v46 = vld [vmem:[#allocation5 + $0x8] sm:$0xff]
    %v47 = vld [vmem:[#allocation5 + $0x10] sm:$0xff]
    %v48 = vld [vmem:[#allocation5 + $0x18] sm:$0xff]
    %v49 = vld [vmem:[%s2] sm:$0x1]
    %v51 = vlaneseq
    %v52 = vshrl.u32 %v51, 7
    %v53 = vsub.s32 0, %v52
    %v54 = vrot.slane %v49, %v53
    %vm56 = vcmask 261120
    %v58 = vsel %vm56, %v43, 0
    %v61 = vsel %vm56, %v44, 0
    %63 = vmatprep.subr.mxu0 0.0
    %64 = vmatpush1.msra.mxu0 %v45
    %65 = vmatprep.subr.mxu0 0.0
    %66 = vmatpush1.msra.mxu0 %v46
    %67 = vmatprep.subr.mxu0 0.0
    %68 = vmatpush1.msra.mxu0 %v47
    %69 = vmatprep.subr.mxu0 0.0
    %70 = vmatpush1.msra.mxu0 %v48
    %71 = vmatprep.subr.mxu0 0.0
    %72 = vmatpush1.msra.mxu0 0.0
    %73 = vmatprep.subr.mxu0 0.0
    %74 = vmatpush1.msra.mxu0 0.0
    %75 = vmatprep.subr.mxu0 0.0
    %76 = vmatpush1.msra.mxu0 0.0
    %77 = vmatprep.subr.mxu0 0.0
    %78 = vmatpush1.msra.mxu0 0.0
    %79 = vmatprep.subr.mxu0 0.0
    %80 = vmatpush1.msra.mxu0 0.0
    %81 = vmatprep.subr.mxu0 0.0
    %82 = vmatpush1.msra.mxu0 0.0
    %83 = vmatprep.subr.mxu0 0.0
    %84 = vmatpush1.msra.mxu0 0.0
    %85 = vmatprep.subr.mxu0 0.0
    %86 = vmatpush1.msra.mxu0 0.0
    %87 = vmatprep.subr.mxu0 0.0
    %88 = vmatpush1.msra.mxu0 0.0
    %89 = vmatprep.subr.mxu0 0.0
    %90 = vmatpush1.msra.mxu0 0.0
    %91 = vmatprep.subr.mxu0 0.0
    %92 = vmatpush1.msra.mxu0 0.0
    %93 = vmatprep.subr.mxu0 0.0
    %94 = vmatpush1.msra.mxu0 0.0
    %95 = vmatprep.subr.mxu0 0.0
    %96 = vmatpush1.msra.mxu0 0.0
    %97 = vmatprep.subr.mxu0 0.0
    %98 = vmatpush1.msra.mxu0 0.0
    %99 = vmatprep.subr.mxu0 0.0
    %100 = vmatpush1.msra.mxu0 0.0
    %101 = vmatprep.subr.mxu0 0.0
    %102 = vmatpush1.msra.mxu0 0.0
    %103 = vmatprep.subr.mxu0 0.0
    %104 = vmatpush1.msra.mxu0 0.0
    %105 = vmatprep.subr.mxu0 0.0
    %106 = vmatpush1.msra.mxu0 0.0
    %107 = vmatprep.subr.mxu0 0.0
    %108 = vmatpush1.msra.mxu0 0.0
    %109 = vmatprep.subr.mxu0 0.0
    %110 = vmatpush1.msra.mxu0 0.0
    %111 = vmatprep.subr.mxu0 0.0
    %112 = vmatpush1.msra.mxu0 0.0
    %113 = vmatprep.subr.mxu0 0.0
    %114 = vmatpush1.msra.mxu0 0.0
    %115 = vmatprep.subr.mxu0 0.0
    %116 = vmatpush1.msra.mxu0 0.0
    %117 = vmatprep.subr.mxu0 0.0
    %118 = vmatpush1.msra.mxu0 0.0
    %119 = vmatprep.subr.mxu0 0.0
    %120 = vmatpush1.msra.mxu0 0.0
    %121 = vmatprep.subr.mxu0 0.0
    %122 = vmatpush1.msra.mxu0 0.0
    %123 = vmatprep.subr.mxu0 0.0
    %124 = vmatpush1.msra.mxu0 0.0
    %125 = vmatprep.subr.mxu0 0.0
    %126 = vmatpush1.msra.mxu0 0.0
    %127 = vmatprep.mubr.f32.mxu0 0.0
    %128 = vmatmul.mubr.f32.gmra.mrb[0].mxu0 %v58
    %v129 = vpop.f32.mrb[0].mxu0
    %v130 = vadd.f32 %v54, %v129
    %v131 = vpop.f32.mrb[0].mxu0
    %132 = vmatprep.mubr.f32.mxu0 0.0
    %133 = vmatmul.mubr.f32.gmra.mrb[0].mxu0 %v61
    %v134 = vpop.f32.mrb[0].mxu0
    %v135 = vadd.f32 %v54, %v134
    %v136 = vpop.f32.mrb[0].mxu0
    %137 = vdwg.mxu0
    %vm138 = vcmask 523264
    %139 = vst.msk [vmem:[#allocation7] sm:$0xff] %vm138, %v130
    %140 = vst.msk [vmem:[#allocation7 + $0x8] sm:$0xff] %vm138, %v135
    // Predicated region
    $region22: #{tpu_custom_call.1} parent=1 // pred_check
      _
    $region23: #{tpu_custom_call.1} parent=1 // pred_check_branch
      %142 = sbr.rel (0) target = $region25
    $region24: #{tpu_custom_call.1} parent=1 // pred_region
      %s144 = ssub.s32 256, 256
      %145 = vsyncadd [#allocation4], %s144
      %s146 = sshll.u32 [#allocation7], 4
      %s147 = int_to_ptr.vmem [resolvable:$true] %s146
      %152 = dma.vmem_to_hbm [thread:$0]  %s147, 256, %s3, [#allocation4], 128, 128, 8
    $region25: #{tpu_custom_call.1} parent=1 // pred_fallthru
      _
    // Predicated region
    $region26: #{tpu_custom_call.1} parent=1 // pred_check
      _
    $region27: #{tpu_custom_call.1} parent=1 // pred_check_branch
      %154 = sbr.rel (0) target = $region29
    $region28: #{tpu_custom_call.1} parent=1 // pred_region
      %155 = dma.done [#allocation4], 256
    $region29: #{tpu_custom_call.1} parent=1 // pred_fallthru
      _
    %156 = vsyncpa [#allocation3], 1
    %157 = vsyncpa [#allocation6], 1
    %158 = vsyncpa [#allocation4], 1

</llo_original>
